<compile_context>
chip_gen: v7x
topology: tpu7x:2x2x1
jax: 0.10.0
libtpu: 0.0.40
codegen_flags: <defaults>
</compile_context>

<pallas_src>
import functools

import jax
import jax.numpy as jnp
from jax.experimental import pallas as pl
from jax.experimental.pallas import tpu as pltpu


# --------------------------------------------------------------------------------------
# Kernel 1: per-batch mean-centering (BaseModel.normalize_w_rgb_mean), lane-dense slab
# --------------------------------------------------------------------------------------
def _mean_center_kernel(x0_ref, x1_ref, x0o_ref, x1o_ref, mean_ref, *, inv_denom):
    x0 = x0_ref[...] * (1.0 / 255.0)
    x1 = x1_ref[...] * (1.0 / 255.0)
    m = (jnp.sum(x0) + jnp.sum(x1)) * inv_denom      # mean over cat((x0,x1)) for this batch elem
    x0o_ref[...] = x0 - m
    x1o_ref[...] = x1 - m
    mean_ref[...] = jnp.full(mean_ref.shape, m, jnp.float32)


def normalize_w_rgb_mean(x0_nchw, x1_nchw, t):
    B, C, H, W = x0_nchw.shape
    N = H * W * C
    # channels-last once, then flatten to a lane-dense (1, 1, H*W*C) slab per batch element
    x0 = jnp.transpose(x0_nchw, (0, 2, 3, 1)).reshape(B, 1, N)
    x1 = jnp.transpose(x1_nchw, (0, 2, 3, 1)).reshape(B, 1, N)
    kernel = functools.partial(_mean_center_kernel, inv_denom=1.0 / float(2 * N))
    x0c, x1c, mean_ = pl.pallas_call(
        kernel,
        out_shape=(jax.ShapeDtypeStruct((B, 1, N), jnp.float32),
                   jax.ShapeDtypeStruct((B, 1, N), jnp.float32),
                   jax.ShapeDtypeStruct((B, 1, 1), jnp.float32)),
        grid=(B,),
        in_specs=[pl.BlockSpec((1, 1, N), lambda i: (i, 0, 0)),
                  pl.BlockSpec((1, 1, N), lambda i: (i, 0, 0))],
        out_specs=(pl.BlockSpec((1, 1, N), lambda i: (i, 0, 0)),
                   pl.BlockSpec((1, 1, N), lambda i: (i, 0, 0)),
                   pl.BlockSpec((1, 1, 1), lambda i: (i, 0, 0))),
        compiler_params=pltpu.CompilerParams(dimension_semantics=("parallel",)),
    )(x0, x1)
    x0c = x0c.reshape(B, H, W, C)                     # NHWC from here on
    x1c = x1c.reshape(B, H, W, C)
    t4 = t.reshape(B, 1, 1, 1)                        # t.unsqueeze(-1).unsqueeze(-1)
    mean_ = mean_.reshape(B, 1, 1, 1)
    return x0c, x1c, t4, mean_


# --------------------------------------------------------------------------------------
# Kernel 2: fused 3x3 conv (+ bias + PReLU) — no im2col, 9 shifted bf16 matmuls in VMEM
# --------------------------------------------------------------------------------------
def _conv3x3_kernel(x_ref, w_ref, b_ref, a_ref, o_ref, *, Ho, Wo, stride, has_prelu):
    cin = w_ref.shape[1]
    cout = w_ref.shape[2]
    acc = jnp.zeros((Ho * Wo, cout), jnp.float32)
    for kh in range(3):
        for kw in range(3):
            if stride == 1:
                patch = x_ref[0, kh:kh + Ho, kw:kw + Wo, :]           # (Ho, Wo, Cin)
            else:  # stride 2: phase-split input (1, 4, Hp2, Wp2, Cin); all slices contiguous
                p = (kh % 2) * 2 + (kw % 2)
                patch = x_ref[0, p, kh // 2:kh // 2 + Ho, kw // 2:kw // 2 + Wo, :]
            patch = patch.reshape(Ho * Wo, cin).astype(jnp.bfloat16)
            acc = acc + jnp.dot(patch, w_ref[kh * 3 + kw],
                                preferred_element_type=jnp.float32)
    y = acc + b_ref[...]
    if has_prelu:
        y = jnp.where(y >= 0.0, y, a_ref[...] * y)                    # PReLU (f32 epilogue)
    o_ref[0] = y


def conv3x3_prelu(x, layer):
    """x: (B, H, W, Cin) NHWC f32. layer: w (9,Cin,Cout) bf16, b/alpha (Cout,) f32, stride."""
    B, H, W, Cin = x.shape
    stride = layer["stride"]
    w = layer["w"]
    Cout = w.shape[2]
    b = layer["b"].reshape(1, Cout)
    has_prelu = layer["alpha"] is not None
    a = (layer["alpha"] if has_prelu else jnp.ones((Cout,), jnp.float32)).reshape(1, Cout)

    if stride == 1:
        Ho, Wo = H, W
        x_in = jnp.pad(x, ((0, 0), (1, 1), (1, 1), (0, 0)))
        in_spec_x = pl.BlockSpec((1, H + 2, W + 2, Cin), lambda i: (i, 0, 0, 0))
    else:  # stride == 2; phase-split so every in-kernel tap slice is static & contiguous
        Ho = (H - 1) // 2 + 1
        Wo = (W - 1) // 2 + 1
        Hp, Wp = H + 2, W + 2
        xp = jnp.pad(x, ((0, 0), (1, 1 + Hp % 2), (1, 1 + Wp % 2), (0, 0)))
        phases = [xp[:, ph::2, pw::2, :] for ph in range(2) for pw in range(2)]
        x_in = jnp.stack(phases, axis=1)              # (B, 4, Hp2, Wp2, Cin)
        Hp2, Wp2 = x_in.shape[2], x_in.shape[3]
        in_spec_x = pl.BlockSpec((1, 4, Hp2, Wp2, Cin), lambda i: (i, 0, 0, 0, 0))

    # TODO(synk): for production resolutions where one padded image slab exceeds the scoped
    # VMEM budget (esp. v7x 64 MiB), row-tile with a halo DMA (pl.ANY + make_async_copy).
    kernel = functools.partial(_conv3x3_kernel, Ho=Ho, Wo=Wo, stride=stride,
                               has_prelu=has_prelu)
    y = pl.pallas_call(
        kernel,
        out_shape=jax.ShapeDtypeStruct((B, Ho * Wo, Cout), jnp.float32),
        grid=(B,),
        in_specs=[in_spec_x,
                  pl.BlockSpec((9, Cin, Cout), lambda i: (0, 0, 0)),
                  pl.BlockSpec((1, Cout), lambda i: (0, 0)),
                  pl.BlockSpec((1, Cout), lambda i: (0, 0))],
        out_specs=pl.BlockSpec((1, Ho * Wo, Cout), lambda i: (i, 0, 0)),
        compiler_params=pltpu.CompilerParams(dimension_semantics=("parallel",)),
    )(x_in, w, b, a)
    return y.reshape(B, Ho, Wo, Cout)                 # contiguous -> free reshape


def conv_stack(x, layers):
    for layer in layers:
        x = conv3x3_prelu(x, layer)
    return x


def feat_pyramid(x, blocks):
    outs = []
    for blk in blocks:
        x = conv_stack(x, blk)
        outs.append(x)
    return outs


# --------------------------------------------------------------------------------------
# Kernel 3: SelfAttnPropagation — KV-tiled online softmax, fused [flow0|flow1] RHS
# --------------------------------------------------------------------------------------
def _self_attn_kernel(x_ref, f01_ref, wq_ref, bq_ref, wk_ref, bk_ref, wv_ref, bv_ref,
                      feat_o_ref, flow_o_ref,
                      q_sc, m_sc, l_sc, accf_sc, accw_sc, *, tkv):
    kv = pl.program_id(1)

    @pl.when(kv == 0)
    def _():
        x = x_ref[0].astype(jnp.bfloat16)                                 # (L, c)
        q_sc[...] = (jnp.dot(x, wq_ref[...], preferred_element_type=jnp.float32)
                     + bq_ref[...])
        m_sc[...] = jnp.full(m_sc.shape, -jnp.inf, jnp.float32)
        l_sc[...] = jnp.zeros(l_sc.shape, jnp.float32)
        accf_sc[...] = jnp.zeros(accf_sc.shape, jnp.float32)
        accw_sc[...] = jnp.zeros(accw_sc.shape, jnp.float32)

    q_bf = q_sc[...].astype(jnp.bfloat16)                                 # (L, c)
    start = pl.multiple_of(kv * tkv, tkv)
    q_kv = q_sc[pl.ds(start, tkv), :].astype(jnp.bfloat16)                # (tkv, c)
    # NOTE: matches the PyTorch reference — k and v are projections of the projected query.
    # wk/bk are pre-scaled by 1/sqrt(c) in the wrapper, so no O(L^2) scale pass is needed.
    k = jnp.dot(q_kv, wk_ref[...], preferred_element_type=jnp.float32) + bk_ref[...]
    v = jnp.dot(q_kv, wv_ref[...], preferred_element_type=jnp.float32) + bv_ref[...]

    s = jnp.dot(q_bf, k.astype(jnp.bfloat16).T, preferred_element_type=jnp.float32)  # (L, tkv)
    m_new = jnp.maximum(m_sc[...], jnp.max(s, axis=-1, keepdims=True))
    alpha = jnp.exp(m_sc[...] - m_new)
    p = jnp.exp(s - m_new)
    l_sc[...] = alpha * l_sc[...] + jnp.sum(p, axis=-1, keepdims=True)
    p_bf = p.astype(jnp.bfloat16)
    accf_sc[...] = alpha * accf_sc[...] + jnp.dot(p_bf, v.astype(jnp.bfloat16),
                                                  preferred_element_type=jnp.float32)
    accw_sc[...] = alpha * accw_sc[...] + jnp.dot(p_bf, f01_ref[0].astype(jnp.bfloat16),
                                                  preferred_element_type=jnp.float32)
    m_sc[...] = m_new

    @pl.when(kv == pl.num_programs(1) - 1)
    def _():
        inv_l = pl.reciprocal(l_sc[...], approx=True)
        feat_o_ref[0] = accf_sc[...] * inv_l
        flow_o_ref[0] = accw_sc[...] * inv_l


def self_attn_propagation(feat_t, flow01, p):
    """feat_t: (B, h, w, c) NHWC; flow01: (B, h, w, 4) = cat(flow0, flow1) channels-last."""
    b, h, w, c = feat_t.shape
    L = h * w
    fdim = flow01.shape[-1]
    x = feat_t.reshape(b, L, c)                       # free (channels-last already)
    f01 = flow01.reshape(b, L, fdim)
    scale = 1.0 / float(c) ** 0.5
    wq = p["wq"].astype(jnp.bfloat16)
    wk = (p["wk"] * scale).astype(jnp.bfloat16)       # fold 1/sqrt(c) into the k projection
    wv = p["wv"].astype(jnp.bfloat16)
    bq = p["bq"].reshape(1, c)
    bk = (p["bk"] * scale).reshape(1, c)
    bv = p["bv"].reshape(1, c)

    tkv = L if L <= 512 else 512
    assert L % tkv == 0, "sequence length must be a multiple of the KV tile"
    nkv = L // tkv
    kernel = functools.partial(_self_attn_kernel, tkv=tkv)
    feat_o, flow_o = pl.pallas_call(
        kernel,
        out_shape=(jax.ShapeDtypeStruct((b, L, c), jnp.float32),
                   jax.ShapeDtypeStruct((b, L, fdim), jnp.float32)),
        grid=(b, nkv),
        in_specs=[pl.BlockSpec((1, L, c), lambda i, j: (i, 0, 0)),
                  pl.BlockSpec((1, tkv, fdim), lambda i, j: (i, j, 0)),
                  pl.BlockSpec((c, c), lambda i, j: (0, 0)),
                  pl.BlockSpec((1, c), lambda i, j: (0, 0)),
                  pl.BlockSpec((c, c), lambda i, j: (0, 0)),
                  pl.BlockSpec((1, c), lambda i, j: (0, 0)),
                  pl.BlockSpec((c, c), lambda i, j: (0, 0)),
                  pl.BlockSpec((1, c), lambda i, j: (0, 0))],
        out_specs=(pl.BlockSpec((1, L, c), lambda i, j: (i, 0, 0)),
                   pl.BlockSpec((1, L, fdim), lambda i, j: (i, 0, 0))),
        scratch_shapes=[pltpu.VMEM((L, c), jnp.float32),     # q (projected query)
                        pltpu.VMEM((L, 1), jnp.float32),     # running max
                        pltpu.VMEM((L, 1), jnp.float32),     # running denom
                        pltpu.VMEM((L, c), jnp.float32),     # feat accumulator
                        pltpu.VMEM((L, fdim), jnp.float32)], # fused flow accumulator
        compiler_params=pltpu.CompilerParams(
            dimension_semantics=("parallel", "arbitrary")),
    )(x, f01, wq, bq, wk, bk, wv, bv)
    feat_o = feat_o.reshape(b, h, w, c)
    flow_o = flow_o.reshape(b, h, w, fdim)
    return feat_o, flow_o[..., :fdim // 2], flow_o[..., fdim // 2:]


# --------------------------------------------------------------------------------------
# Deterministic parameter init (shapes from __init__; synthetic, no checkpoint load)
# --------------------------------------------------------------------------------------
def _conv_init(key, cin, cout, alpha_init):
    kw, kb = jax.random.split(key)
    w = (jax.random.normal(kw, (9, cin, cout), jnp.float32)
         * (1.0 / jnp.sqrt(float(cin * 9)))).astype(jnp.bfloat16)   # resident weights in bf16
    b = jax.random.normal(kb, (cout,), jnp.float32) * 0.01
    alpha = None if alpha_init is None else jnp.full((cout,), alpha_init, jnp.float32)
    return {"w": w, "b": b, "alpha": alpha}


def _dense_init(key, fan_in, fan_out):
    kw, kb = jax.random.split(key)
    w = jax.random.normal(kw, (fan_in, fan_out), jnp.float32) * (1.0 / jnp.sqrt(float(fan_in)))
    b = jax.random.normal(kb, (fan_out,), jnp.float32) * 0.01
    return w, b


def init_params(key, channels, depths):
    params = {}
    # FeatPyramid encoder: Conv(stride 2)+PReLU(0.1), then (depth-1) x Conv(stride 1)+PReLU(0.1)
    cins = (3,) + tuple(channels)
    enc = []
    for i in range(len(channels)):
        kblk = jax.random.fold_in(key, 100 + i)
        layers = [dict(_conv_init(jax.random.fold_in(kblk, 0), cins[i], channels[i], 0.1),
                       stride=2)]
        for d in range(depths[i] - 1):
            layers.append(dict(_conv_init(jax.random.fold_in(kblk, 1 + d),
                                          channels[i], channels[i], 0.1), stride=1))
        enc.append(layers)
    params["encoder"] = enc

    # motion2flow: Conv(64->32)+PReLU, Conv(32->32)+PReLU, Conv(32->2)
    k = jax.random.fold_in(key, 200)
    specs = [(64, 32, 0.25), (32, 32, 0.25), (32, 2, None)]
    params["motion2flow"] = [dict(_conv_init(jax.random.fold_in(k, i), ci, co, a), stride=1)
                             for i, (ci, co, a) in enumerate(specs)]

    # motions2bwarpflow: Conv(192->64)+PReLU, Conv(64->32)+PReLU, Conv(32->4)
    k = jax.random.fold_in(key, 300)
    specs = [(64 * 3, 64, 0.25), (64, 32, 0.25), (32, 4, None)]
    params["motions2bwarpflow"] = [dict(_conv_init(jax.random.fold_in(k, i), ci, co, a), stride=1)
                                   for i, (ci, co, a) in enumerate(specs)]

    # SelfAttnPropagation(channels[-1]): three Linear(C, C)
    c3 = channels[-1]
    k = jax.random.fold_in(key, 400)
    wq, bq = _dense_init(jax.random.fold_in(k, 0), c3, c3)
    wk, bk = _dense_init(jax.random.fold_in(k, 1), c3, c3)
    wv, bv = _dense_init(jax.random.fold_in(k, 2), c3, c3)
    params["self_attention_t_3"] = {"wq": wq, "bq": bq, "wk": wk, "bk": bk, "wv": wv, "bv": bv}
    # NOTE: BaseModel.layer (Linear(3,64)) is never used in forward -> omitted.
    return params


# --------------------------------------------------------------------------------------
# MADATv1 forward (the portion whose source is provided); wrapper I/O stays NCHW
# --------------------------------------------------------------------------------------
def madat_v1_forward(params, x0_raw, x1_raw, t, standin_key):
    x0, x1, t4, mean_ = normalize_w_rgb_mean(x0_raw, x1_raw, t)      # NHWC features from here

    feat0_1, feat0_2, feat0_3 = feat_pyramid(x0, params["encoder"])
    feat1_1, feat1_2, feat1_3 = feat_pyramid(x1, params["encoder"])
    b, fh, fw, _ = feat0_3.shape

    # TODO(synk): InterFrameAttention (`self.corr`) source not provided -> deterministic
    # stand-in motion fields so the downstream conv stacks run with the exact semantics.
    k01, k10 = jax.random.split(standin_key)
    motion_01 = jax.random.normal(k01, (b, fh, fw, 64), jnp.float32)
    motion_10 = jax.random.normal(k10, (b, fh, fw, 64), jnp.float32)
    motion_0t = motion_01 * t4
    motion_1t = motion_10 * (1.0 - t4)

    flows = conv_stack(jnp.concatenate((motion_0t, motion_1t), axis=0), params["motion2flow"])
    f0t_3, f1t_3 = jnp.split(flows, 2, axis=0)

    # TODO(synk): fwarp_using_two_frames + cross-attended features unavailable -> stand-in feat_t_3.
    feat_t_3 = 0.5 * (feat0_3 + feat1_3)

    bwflow = conv_stack(jnp.concatenate((motion_0t, motion_1t, feat_t_3), axis=-1),
                        params["motions2bwarpflow"])                 # (B, fh, fw, 4)

    self_attended_feat_t_3, ft0_3, ft1_3 = self_attn_propagation(
        feat_t_3, bwflow, params["self_attention_t_3"])

    # TODO(synk): bwarp, query_builder2/1 (ConvTranspose2d), DATwithMotionEstimation decoders,
    # Unet rgb_builder and the loss terms are not defined in the provided source -> stop here.
    def to_nchw(z):
        return jnp.transpose(z, (0, 3, 1, 2))

    return (to_nchw(self_attended_feat_t_3), to_nchw(ft0_3), to_nchw(ft1_3),
            to_nchw(f0t_3), to_nchw(f1t_3),
            to_nchw(feat0_1), to_nchw(feat0_2), to_nchw(feat1_1), to_nchw(feat1_2), mean_)


# --------------------------------------------------------------------------------------
if __name__ == "__main__":
    key = jax.random.PRNGKey(0)
    B, H, W = 2, 32, 32
    channels = (16, 32, 64)
    depths = (2, 2, 2)

    params = init_params(key, channels, depths)

    kx0, kx1, kt, km = jax.random.split(jax.random.fold_in(key, 12345), 4)
    x0 = jax.random.uniform(kx0, (B, 3, H, W), jnp.float32, 0.0, 255.0)   # 8-bit-range frames
    x1 = jax.random.uniform(kx1, (B, 3, H, W), jnp.float32, 0.0, 255.0)
    t = jax.random.uniform(kt, (B, 1), jnp.float32, 0.1, 0.9)

    outs = madat_v1_forward(params, x0, x1, t, km)
    jax.block_until_ready(outs)
    print("KERNEL_OK")
</pallas_src>

<mosaic_0001>
module attributes {stable_mosaic.version = 11 : i64} {
  func.func @_mean_center_kernel(%arg0: i32, %arg1: memref<1x1x3072xf32, #tpu.memory_space<vmem>>, %arg2: memref<1x1x3072xf32, #tpu.memory_space<vmem>>, %arg3: memref<1x1x3072xf32, #tpu.memory_space<vmem>>, %arg4: memref<1x1x3072xf32, #tpu.memory_space<vmem>>, %arg5: memref<1x1x1xf32, #tpu.memory_space<vmem>>) attributes {dimension_semantics = [#tpu.dimension_semantics<parallel>], iteration_bounds = array<i64: 2>, scalar_prefetch = 0 : i64, scratch_operands = 0 : i64, tpu.core_type = #tpu.core_type<tc>, window_params = [{transform_indices = @transform_0, window_bounds = array<i64: 1, 1, 3072>}, {transform_indices = @transform_1, window_bounds = array<i64: 1, 1, 3072>}, {transform_indices = @transform_2, window_bounds = array<i64: 1, 1, 3072>}, {transform_indices = @transform_3, window_bounds = array<i64: 1, 1, 3072>}, {transform_indices = @transform_4, window_bounds = array<i64: 1, 1, 1>}]} {
    %c0 = arith.constant 0 : index
    %c0_0 = arith.constant 0 : index
    %c0_1 = arith.constant 0 : index
    %0 = vector.load %arg1[%c0, %c0_0, %c0_1] : memref<1x1x3072xf32, #tpu.memory_space<vmem>>, vector<1x1x3072xf32>
    %cst = arith.constant 0.00392156886 : f32
    %1 = vector.broadcast %cst : f32 to vector<1x1x3072xf32>
    %2 = arith.mulf %0, %1 : vector<1x1x3072xf32>
    %c0_2 = arith.constant 0 : index
    %c0_3 = arith.constant 0 : index
    %c0_4 = arith.constant 0 : index
    %3 = vector.load %arg2[%c0_2, %c0_3, %c0_4] : memref<1x1x3072xf32, #tpu.memory_space<vmem>>, vector<1x1x3072xf32>
    %cst_5 = arith.constant 0.00392156886 : f32
    %4 = vector.broadcast %cst_5 : f32 to vector<1x1x3072xf32>
    %5 = arith.mulf %3, %4 : vector<1x1x3072xf32>
    %6 = vector.shape_cast %2 : vector<1x1x3072xf32> to vector<1x1x1x3072xf32>
    %cst_6 = arith.constant dense<0.000000e+00> : vector<1xf32>
    %7 = vector.multi_reduction <add>, %6, %cst_6 [1, 2, 3] : vector<1x1x1x3072xf32> to vector<1xf32>
    %8 = vector.shape_cast %7 : vector<1xf32> to vector<1x1x1x1xf32>
    %9 = vector.extract %8[0, 0, 0, 0] : f32 from vector<1x1x1x1xf32>
    %10 = vector.shape_cast %5 : vector<1x1x3072xf32> to vector<1x1x1x3072xf32>
    %cst_7 = arith.constant dense<0.000000e+00> : vector<1xf32>
    %11 = vector.multi_reduction <add>, %10, %cst_7 [1, 2, 3] : vector<1x1x1x3072xf32> to vector<1xf32>
    %12 = vector.shape_cast %11 : vector<1xf32> to vector<1x1x1x1xf32>
    %13 = vector.extract %12[0, 0, 0, 0] : f32 from vector<1x1x1x1xf32>
    %14 = arith.addf %9, %13 : f32
    %cst_8 = arith.constant 1.62760422E-4 : f32
    %15 = arith.mulf %14, %cst_8 : f32
    %16 = vector.broadcast %15 : f32 to vector<1x1x3072xf32>
    %17 = arith.subf %2, %16 : vector<1x1x3072xf32>
    %c0_9 = arith.constant 0 : index
    %c0_10 = arith.constant 0 : index
    %c0_11 = arith.constant 0 : index
    %18 = vector.load %arg3[%c0_9, %c0_10, %c0_11] : memref<1x1x3072xf32, #tpu.memory_space<vmem>>, vector<1x1x3072xf32>
    tpu.vector_store %arg3[%c0_9, %c0_10, %c0_11], %17 {strides = array<i32>} : memref<1x1x3072xf32, #tpu.memory_space<vmem>>, vector<1x1x3072xf32>,
    %19 = vector.broadcast %15 : f32 to vector<1x1x3072xf32>
    %20 = arith.subf %5, %19 : vector<1x1x3072xf32>
    %c0_12 = arith.constant 0 : index
    %c0_13 = arith.constant 0 : index
    %c0_14 = arith.constant 0 : index
    %21 = vector.load %arg4[%c0_12, %c0_13, %c0_14] : memref<1x1x3072xf32, #tpu.memory_space<vmem>>, vector<1x1x3072xf32>
    tpu.vector_store %arg4[%c0_12, %c0_13, %c0_14], %20 {strides = array<i32>} : memref<1x1x3072xf32, #tpu.memory_space<vmem>>, vector<1x1x3072xf32>,
    %22 = vector.broadcast %15 : f32 to vector<1x1x1xf32>
    %c0_15 = arith.constant 0 : index
    %c0_16 = arith.constant 0 : index
    %c0_17 = arith.constant 0 : index
    %23 = vector.load %arg5[%c0_15, %c0_16, %c0_17] : memref<1x1x1xf32, #tpu.memory_space<vmem>>, vector<1x1x1xf32>
    tpu.vector_store %arg5[%c0_15, %c0_16, %c0_17], %22 {strides = array<i32>} : memref<1x1x1xf32, #tpu.memory_space<vmem>>, vector<1x1x1xf32>,
    return
  }
  func.func @transform_0(%arg0: i32) -> (i32, i32, i32) {
    %c0_i32 = arith.constant 0 : i32
    %c0_i32_0 = arith.constant 0 : i32
    %c0_i32_1 = arith.constant 0 : i32
    return %arg0, %c0_i32, %c0_i32_0 : i32, i32, i32
  }
  func.func @transform_1(%arg0: i32) -> (i32, i32, i32) {
    %c0_i32 = arith.constant 0 : i32
    %c0_i32_0 = arith.constant 0 : i32
    %c0_i32_1 = arith.constant 0 : i32
    return %arg0, %c0_i32, %c0_i32_0 : i32, i32, i32
  }
  func.func @transform_2(%arg0: i32) -> (i32, i32, i32) {
    %c0_i32 = arith.constant 0 : i32
    %c0_i32_0 = arith.constant 0 : i32
    %c0_i32_1 = arith.constant 0 : i32
    return %arg0, %c0_i32, %c0_i32_0 : i32, i32, i32
  }
  func.func @transform_3(%arg0: i32) -> (i32, i32, i32) {
    %c0_i32 = arith.constant 0 : i32
    %c0_i32_0 = arith.constant 0 : i32
    %c0_i32_1 = arith.constant 0 : i32
    return %arg0, %c0_i32, %c0_i32_0 : i32, i32, i32
  }
  func.func @transform_4(%arg0: i32) -> (i32, i32, i32) {
    %c0_i32 = arith.constant 0 : i32
    %c0_i32_0 = arith.constant 0 : i32
    %c0_i32_1 = arith.constant 0 : i32
    return %arg0, %c0_i32, %c0_i32_0 : i32, i32, i32
  }
}

</mosaic_0001>

<llo_original>
// kernel: tpu_custom_call.1
$region0: #{tpu_custom_call.1}
  #allocation0 [shape = 'u32[]', space=smem, size = 0x4, offset = 0x4, fixed_abs, tag = 'smem constant byte address 0x4 - core index']
  #allocation1 [shape = 'u32[144,128]{1,0:T(1,128)}', space=vmem, size = 0x12000, scoped, tag = 'internal scratch']
  %s0 = inlined_call_operand.hbm [shape: f32[2,1,3072], index: 0, kind: input, shape index: {}]
  %s1 = inlined_call_operand.hbm [shape: f32[2,1,3072], index: 1, kind: input, shape index: {}]
  %s2 = inlined_call_operand.hbm [shape: f32[2,1,3072], index: 2, kind: output, shape index: {0}]
  %s3 = inlined_call_operand.hbm [shape: f32[2,1,3072], index: 3, kind: output, shape index: {1}]
  %s4 = inlined_call_operand.vmem [shape: f32[2,1,1], index: 4, kind: output, shape index: {2}]
  %5 = xla_tuple %s2, %s3, %s4
  %s6 = sld [smem:[#allocation0]]
  $region65: #{tpu_custom_call.1} parent=0
    _
  %s8 = ssub.s32 1, %s6
  %s9 = scalar_select 0, %s8, %s6
  $region1: #{tpu_custom_call.1} parent=0
    #allocation2 [shape = 'u8[24576]{0}', space=vmem, size = 0x6000, scoped, tag = 'input window, operand 0']
    #allocation3 [shape = 's32[2]{0}', space=sflag, size = 0x8, scoped, tag = 'scoped memory for tpu_custom_call.1']
    #allocation4 [shape = 's32[2]{0}', space=sflag, size = 0x8, scoped, tag = 'scoped memory for tpu_custom_call.1']
    #allocation5 [shape = 'u8[24576]{0}', space=vmem, size = 0x6000, scoped, tag = 'input window, operand 1']
    #allocation6 [shape = 's32[2]{0}', space=sflag, size = 0x8, scoped, tag = 'scoped memory for tpu_custom_call.1']
    #allocation7 [shape = 'u8[24576]{0}', space=vmem, size = 0x6000, scoped, tag = 'output window, operand 0']
    #allocation8 [shape = 'u8[24576]{0}', space=vmem, size = 0x6000, scoped, tag = 'output window, operand 1']
    #allocation9 [shape = 's32[2]{0}', space=sflag, size = 0x8, scoped, tag = 'scoped memory for tpu_custom_call.1']
    %10 = vsyncpa [#allocation3], 0
    %s11 = scalar_lea.sflag [#allocation3], 1
    %12 = vsyncpa %s11, 0
    %13 = vsyncpa [#allocation6], 0
    %s14 = scalar_lea.sflag [#allocation6], 1
    %15 = vsyncpa %s14, 0
    %16 = vsyncpa [#allocation4], 0
    %s17 = scalar_lea.sflag [#allocation4], 1
    %18 = vsyncpa %s17, 0
    %19 = vsyncpa [#allocation9], 0
    %s20 = scalar_lea.sflag [#allocation9], 1
    %21 = vsyncpa %s20, 0
    loop: start=0, step=1, limit=4
    $region2: #{tpu_custom_call.1} parent=1 // loop_pre_header
      _
    $region3: #{tpu_custom_call.1} parent=1 // loop_header
      %s23 = sphi 0, %s27
      %p24 = scmp.ge.s32.totalorder %s23, 4
      %s33 = sphi 0, %s35
      %s36 = sphi 0, %s33
      %s37 = sphi 0, %s36
      %s53 = sphi 0, %s37
      %s59 = sphi 0, %s61
      %s62 = sphi 0, %s59
      %s63 = sphi 0, %s62
      %s79 = sphi 0, %s63
      %s85 = sphi 0, %s87
      %s88 = sphi 0, %s85
      %s89 = sphi 0, %s88
      %s105 = sphi 0, %s89
      %s111 = sphi 0, %s113
      %s114 = sphi 0, %s111
      %s115 = sphi 0, %s114
      %s131 = sphi 0, %s115
      %s137 = sphi 0, %s139
      %s140 = sphi 0, %s137
      %s141 = sphi 0, %s140
      %s157 = sphi 0, %s141
    $region4: #{tpu_custom_call.1} parent=1 // loop_header_branch
      %26 = sbr.rel (%p24) target = $region8
    $region5: #{tpu_custom_call.1} parent=1 // loop_body
      %s28 = ssub.s32 %s23, 1
      %s29 = ssub.s32 %s23, 2
      %s30 = sadd.s32 %s23, 1
      %s31 = ssub.s32 %s23, %s30
      %p32 = scmp.eq.s32.totalorder %s31, 0
      %s34 = sadd.s32 %s33, 1
      %s35 = scalar_select %p32, %s33, %s34
      %p38 = pneg %p32
      %p39 = scmp.eq.s32.totalorder %s23, 1
      %p40 = por %p38, %p39
      %p41 = scmp.ne.s32.totalorder %s33, %s36
      %p42 = scmp.eq.s32.totalorder %s23, 0
      %p43 = por %p41, %p42
      %p44 = scmp.ne.s32.totalorder %s33, %s36
      %p45 = scmp.eq.s32.totalorder %s28, 1
      %p46 = por %p44, %p45
      %p47 = scmp.ne.s32.totalorder %s36, %s37
      %p48 = scmp.eq.s32.totalorder %s28, 0
      %p49 = por %p47, %p48
      %p50 = scmp.ne.s32.totalorder %s36, %s37
      %p51 = scmp.eq.s32.totalorder %s29, 1
      %p52 = por %p50, %p51
      %p54 = scmp.ne.s32.totalorder %s37, %s53
      %p55 = scmp.eq.s32.totalorder %s29, 0
      %p56 = por %p54, %p55
      %s57 = ssub.s32 %s23, %s30
      %p58 = scmp.eq.s32.totalorder %s57, 0
      %s60 = sadd.s32 %s59, 1
      %s61 = scalar_select %p58, %s59, %s60
      %p64 = pneg %p58
      %p65 = scmp.eq.s32.totalorder %s23, 1
      %p66 = por %p64, %p65
      %p67 = scmp.ne.s32.totalorder %s59, %s62
      %p68 = scmp.eq.s32.totalorder %s23, 0
      %p69 = por %p67, %p68
      %p70 = scmp.ne.s32.totalorder %s59, %s62
      %p71 = scmp.eq.s32.totalorder %s28, 1
      %p72 = por %p70, %p71
      %p73 = scmp.ne.s32.totalorder %s62, %s63
      %p74 = scmp.eq.s32.totalorder %s28, 0
      %p75 = por %p73, %p74
      %p76 = scmp.ne.s32.totalorder %s62, %s63
      %p77 = scmp.eq.s32.totalorder %s29, 1
      %p78 = por %p76, %p77
      %p80 = scmp.ne.s32.totalorder %s63, %s79
      %p81 = scmp.eq.s32.totalorder %s29, 0
      %p82 = por %p80, %p81
      %s83 = ssub.s32 %s23, %s30
      %p84 = scmp.eq.s32.totalorder %s83, 0
      %s86 = sadd.s32 %s85, 1
      %s87 = scalar_select %p84, %s85, %s86
      %p90 = pneg %p84
      %p91 = scmp.eq.s32.totalorder %s23, 1
      %p92 = por %p90, %p91
      %p93 = scmp.ne.s32.totalorder %s85, %s88
      %p94 = scmp.eq.s32.totalorder %s23, 0
      %p95 = por %p93, %p94
      %p96 = scmp.ne.s32.totalorder %s85, %s88
      %p97 = scmp.eq.s32.totalorder %s28, 1
      %p98 = por %p96, %p97
      %p99 = scmp.ne.s32.totalorder %s88, %s89
      %p100 = scmp.eq.s32.totalorder %s28, 0
      %p101 = por %p99, %p100
      %p102 = scmp.ne.s32.totalorder %s88, %s89
      %p103 = scmp.eq.s32.totalorder %s29, 1
      %p104 = por %p102, %p103
      %p106 = scmp.ne.s32.totalorder %s89, %s105
      %p107 = scmp.eq.s32.totalorder %s29, 0
      %p108 = por %p106, %p107
      %s109 = ssub.s32 %s23, %s30
      %p110 = scmp.eq.s32.totalorder %s109, 0
      %s112 = sadd.s32 %s111, 1
      %s113 = scalar_select %p110, %s111, %s112
      %p116 = pneg %p110
      %p117 = scmp.eq.s32.totalorder %s23, 1
      %p118 = por %p116, %p117
      %p119 = scmp.ne.s32.totalorder %s111, %s114
      %p120 = scmp.eq.s32.totalorder %s23, 0
      %p121 = por %p119, %p120
      %p122 = scmp.ne.s32.totalorder %s111, %s114
      %p123 = scmp.eq.s32.totalorder %s28, 1
      %p124 = por %p122, %p123
      %p125 = scmp.ne.s32.totalorder %s114, %s115
      %p126 = scmp.eq.s32.totalorder %s28, 0
      %p127 = por %p125, %p126
      %p128 = scmp.ne.s32.totalorder %s114, %s115
      %p129 = scmp.eq.s32.totalorder %s29, 1
      %p130 = por %p128, %p129
      %p132 = scmp.ne.s32.totalorder %s115, %s131
      %p133 = scmp.eq.s32.totalorder %s29, 0
      %p134 = por %p132, %p133
      %s135 = ssub.s32 %s23, %s30
      %p136 = scmp.eq.s32.totalorder %s135, 0
      %s138 = sadd.s32 %s137, 1
      %s139 = scalar_select %p136, %s137, %s138
      %p142 = pneg %p136
      %p143 = scmp.eq.s32.totalorder %s23, 1
      %p144 = por %p142, %p143
      %p145 = scmp.ne.s32.totalorder %s137, %s140
      %p146 = scmp.eq.s32.totalorder %s23, 0
      %p147 = por %p145, %p146
      %p148 = scmp.ne.s32.totalorder %s137, %s140
      %p149 = scmp.eq.s32.totalorder %s28, 1
      %p150 = por %p148, %p149
      %p151 = scmp.ne.s32.totalorder %s140, %s141
      %p152 = scmp.eq.s32.totalorder %s28, 0
      %p153 = por %p151, %p152
      %p154 = scmp.ne.s32.totalorder %s140, %s141
      %p155 = scmp.eq.s32.totalorder %s29, 1
      %p156 = por %p154, %p155
      %p158 = scmp.ne.s32.totalorder %s141, %s157
      %p159 = scmp.eq.s32.totalorder %s29, 0
      %p160 = por %p158, %p159
      %p161 = scmp.le.s32.totalorder 1, %s23
      %p162 = scmp.lt.s32.totalorder %s23, 3
      %p163 = pnand %p161, %p162
      %p164 = pneg %p163
      // Predicated region
      $region9: #{tpu_custom_call.1} parent=5 // pred_check
        _
      $region10: #{tpu_custom_call.1} parent=5 // pred_check_branch
        %166 = sbr.rel (%p163) target = $region12
      $region11: #{tpu_custom_call.1} parent=5 // pred_region
        %s167 = ssub.s32 %s23, 1
      $region12: #{tpu_custom_call.1} parent=5 // pred_fallthru
        _
      %p168 = scmp.lt.s32.totalorder %s23, 2
      // Predicated region
      $region13: #{tpu_custom_call.1} parent=5 // pred_check
        %p169 = pneg %p168
      $region14: #{tpu_custom_call.1} parent=5 // pred_check_branch
        %171 = sbr.rel (%p169) target = $region16
      $region15: #{tpu_custom_call.1} parent=5 // pred_region
        // Predicated region
        $region17: #{tpu_custom_call.1} parent=15 // pred_check
          %p172 = pneg %p43
        $region18: #{tpu_custom_call.1} parent=15 // pred_check_branch
          %174 = sbr.rel (%p172) target = $region20
        $region19: #{tpu_custom_call.1} parent=15 // pred_region
          %s175 = sand.u32 %s33, 1
          %s176 = scalar_lea.sflag [#allocation3], %s175
          %s177 = sand.u32 %s33, 1
          %s178 = smul.addr %s177, 24
          %s179 = scalar_lea.vmem [#allocation2], %s178
          %s181 = ssub.s32 384, 384
          %182 = vsyncadd %s176, %s181
          %s183 = smul.addr %s23, 24
          %s184 = smul.addr %s183, 16
          %s185 = scalar_lea.hbm %s0, %s184
          %s187 = sshll.u32 %s179, 4
          %s188 = int_to_ptr.vmem [resolvable:$true] %s187
          %190 = dma.hbm_to_vmem [thread:$0]  %s185, 384, %s188, %s176
        $region20: #{tpu_custom_call.1} parent=15 // pred_fallthru
          _
        // Predicated region
        $region21: #{tpu_custom_call.1} parent=15 // pred_check
          %p191 = pneg %p69
        $region22: #{tpu_custom_call.1} parent=15 // pred_check_branch
          %193 = sbr.rel (%p191) target = $region24
        $region23: #{tpu_custom_call.1} parent=15 // pred_region
          %s194 = sand.u32 %s59, 1
          %s195 = scalar_lea.sflag [#allocation6], %s194
          %s196 = sand.u32 %s59, 1
          %s197 = smul.addr %s196, 24
          %s198 = scalar_lea.vmem [#allocation5], %s197
          %s200 = ssub.s32 384, 384
          %201 = vsyncadd %s195, %s200
          %s202 = smul.addr %s23, 24
          %s203 = smul.addr %s202, 16
          %s204 = scalar_lea.hbm %s1, %s203
          %s206 = sshll.u32 %s198, 4
          %s207 = int_to_ptr.vmem [resolvable:$true] %s206
          %209 = dma.hbm_to_vmem [thread:$0]  %s204, 384, %s207, %s195
        $region24: #{tpu_custom_call.1} parent=15 // pred_fallthru
          _
      $region16: #{tpu_custom_call.1} parent=5 // pred_fallthru
        _
      %p210 = scmp.le.s32.totalorder 1, %s23
      %p211 = scmp.lt.s32.totalorder %s23, 3
      %p212 = pnand %p210, %p211
      %p213 = pneg %p212
      // Predicated region
      $region25: #{tpu_custom_call.1} parent=5 // pred_check
        _
      $region26: #{tpu_custom_call.1} parent=5 // pred_check_branch
        %215 = sbr.rel (%p212) target = $region28
      $region27: #{tpu_custom_call.1} parent=5 // pred_region
        %s216 = ssub.s32 %s23, 1
        %s217 = sand.u32 %s36, 1
        %s218 = scalar_lea.sflag [#allocation3], %s217
        %s219 = sand.u32 %s36, 1
        %s220 = smul.addr %s219, 24
        %s221 = scalar_lea.vmem [#allocation2], %s220
        // Predicated region
        $region29: #{tpu_custom_call.1} parent=27 // pred_check
          %p222 = pneg %p49
        $region30: #{tpu_custom_call.1} parent=27 // pred_check_branch
          %224 = sbr.rel (%p222) target = $region32
        $region31: #{tpu_custom_call.1} parent=27 // pred_region
          %225 = dma.done %s218, 384
        $region32: #{tpu_custom_call.1} parent=27 // pred_fallthru
          _
        %s226 = sand.u32 %s62, 1
        %s227 = scalar_lea.sflag [#allocation6], %s226
        %s228 = sand.u32 %s62, 1
        %s229 = smul.addr %s228, 24
        %s230 = scalar_lea.vmem [#allocation5], %s229
        // Predicated region
        $region33: #{tpu_custom_call.1} parent=27 // pred_check
          %p231 = pneg %p75
        $region34: #{tpu_custom_call.1} parent=27 // pred_check_branch
          %233 = sbr.rel (%p231) target = $region36
        $region35: #{tpu_custom_call.1} parent=27 // pred_region
          %234 = dma.done %s227, 384
        $region36: #{tpu_custom_call.1} parent=27 // pred_fallthru
          _
        %s235 = sand.u32 %s36, 1
        %s236 = scalar_lea.sflag [#allocation3], %s235
        %s237 = sand.u32 %s36, 1
        %s238 = smul.addr %s237, 24
        %s239 = scalar_lea.vmem [#allocation2], %s238
        %p240 = pneg %p49
        %p241 = pneg %p46
        %s242 = sand.u32 %s62, 1
        %s243 = scalar_lea.sflag [#allocation6], %s242
        %s244 = sand.u32 %s62, 1
        %s245 = smul.addr %s244, 24
        %s246 = scalar_lea.vmem [#allocation5], %s245
        %p247 = pneg %p75
        %p248 = pneg %p72
        %p249 = pneg %p101
        %p250 = pneg %p98
        %s251 = sand.u32 %s88, 1
        %s252 = scalar_lea.sflag [#allocation4], %s251
        %s253 = sand.u32 %s88, 1
        %s254 = smul.addr %s253, 24
        %s255 = scalar_lea.vmem [#allocation7], %s254
        %p256 = pneg %p127
        %p257 = pneg %p124
        %s258 = sand.u32 %s114, 1
        %s259 = scalar_lea.sflag [#allocation9], %s258
        %s260 = sand.u32 %s114, 1
        %s261 = smul.addr %s260, 24
        %s262 = scalar_lea.vmem [#allocation8], %s261
        %p263 = pneg %p153
        %p264 = pneg %p150
        %p265 = scmp.lt.s32.totalorder %s28, 1
        %s266 = scalar_select %p265, %s28, 1
        %s267 = scalar_lea.vmem %s4, %s266
        %p268 = scmp.lt.s32.totalorder %s28, 1
        %s269 = scalar_select %p268, %s28, 1
        %s270 = scalar_lea.vmem %s4, %s269
        %v271 = vld [vmem:[%s221] sm:$0xff]
        %v272 = vld [vmem:[%s221 + $0x8] sm:$0xff]
        %v273 = vld [vmem:[%s221 + $0x10] sm:$0xff]
        %v274 = vmul.f32 %v271, 0.003921569
        %v275 = vmul.f32 %v272, 0.003921569
        %v276 = vmul.f32 %v273, 0.003921569
        %v277 = vld [vmem:[%s230] sm:$0xff]
        %v278 = vld [vmem:[%s230 + $0x8] sm:$0xff]
        %v279 = vld [vmem:[%s230 + $0x10] sm:$0xff]
        %v280 = vmul.f32 %v277, 0.003921569
        %v281 = vmul.f32 %v278, 0.003921569
        %v282 = vmul.f32 %v279, 0.003921569
        %v286 = vlaneseq
        %v287 = vshrl.u32 %v286, 7
        %v288 = vsub.s32 0, %v287
        %v289 = vrot.slane %v274, %v288
        %v290 = vlaneseq
        %v291 = vshrl.u32 %v290, 7
        %v292 = vsub.s32 1, %v291
        %v293 = vrot.slane %v274, %v292
        %v294 = vlaneseq
        %v295 = vshrl.u32 %v294, 7
        %v296 = vsub.s32 2, %v295
        %v297 = vrot.slane %v274, %v296
        %v298 = vlaneseq
        %v299 = vshrl.u32 %v298, 7
        %v300 = vsub.s32 3, %v299
        %v301 = vrot.slane %v274, %v300
        %v302 = vlaneseq
        %v303 = vshrl.u32 %v302, 7
        %v304 = vsub.s32 4, %v303
        %v305 = vrot.slane %v274, %v304
        %v306 = vlaneseq
        %v307 = vshrl.u32 %v306, 7
        %v308 = vsub.s32 5, %v307
        %v309 = vrot.slane %v274, %v308
        %v310 = vlaneseq
        %v311 = vshrl.u32 %v310, 7
        %v312 = vsub.s32 6, %v311
        %v313 = vrot.slane %v274, %v312
        %v314 = vlaneseq
        %v315 = vshrl.u32 %v314, 7
        %v316 = vsub.s32 7, %v315
        %v317 = vrot.slane %v274, %v316
        %v318 = vlaneseq
        %v319 = vshrl.u32 %v318, 7
        %v320 = vsub.s32 0, %v319
        %v321 = vrot.slane %v275, %v320
        %v322 = vlaneseq
        %v323 = vshrl.u32 %v322, 7
        %v324 = vsub.s32 1, %v323
        %v325 = vrot.slane %v275, %v324
        %v326 = vlaneseq
        %v327 = vshrl.u32 %v326, 7
        %v328 = vsub.s32 2, %v327
        %v329 = vrot.slane %v275, %v328
        %v330 = vlaneseq
        %v331 = vshrl.u32 %v330, 7
        %v332 = vsub.s32 3, %v331
        %v333 = vrot.slane %v275, %v332
        %v334 = vlaneseq
        %v335 = vshrl.u32 %v334, 7
        %v336 = vsub.s32 4, %v335
        %v337 = vrot.slane %v275, %v336
        %v338 = vlaneseq
        %v339 = vshrl.u32 %v338, 7
        %v340 = vsub.s32 5, %v339
        %v341 = vrot.slane %v275, %v340
        %v342 = vlaneseq
        %v343 = vshrl.u32 %v342, 7
        %v344 = vsub.s32 6, %v343
        %v345 = vrot.slane %v275, %v344
        %v346 = vlaneseq
        %v347 = vshrl.u32 %v346, 7
        %v348 = vsub.s32 7, %v347
        %v349 = vrot.slane %v275, %v348
        %v350 = vlaneseq
        %v351 = vshrl.u32 %v350, 7
        %v352 = vsub.s32 0, %v351
        %v353 = vrot.slane %v276, %v352
        %v354 = vlaneseq
        %v355 = vshrl.u32 %v354, 7
        %v356 = vsub.s32 1, %v355
        %v357 = vrot.slane %v276, %v356
        %v358 = vlaneseq
        %v359 = vshrl.u32 %v358, 7
        %v360 = vsub.s32 2, %v359
        %v361 = vrot.slane %v276, %v360
        %v362 = vlaneseq
        %v363 = vshrl.u32 %v362, 7
        %v364 = vsub.s32 3, %v363
        %v365 = vrot.slane %v276, %v364
        %v366 = vlaneseq
        %v367 = vshrl.u32 %v366, 7
        %v368 = vsub.s32 4, %v367
        %v369 = vrot.slane %v276, %v368
        %v370 = vlaneseq
        %v371 = vshrl.u32 %v370, 7
        %v372 = vsub.s32 5, %v371
        %v373 = vrot.slane %v276, %v372
        %v374 = vlaneseq
        %v375 = vshrl.u32 %v374, 7
        %v376 = vsub.s32 6, %v375
        %v377 = vrot.slane %v276, %v376
        %v378 = vlaneseq
        %v379 = vshrl.u32 %v378, 7
        %v380 = vsub.s32 7, %v379
        %v381 = vrot.slane %v276, %v380
        %vm406 = vcmask 1040384
        %v407 = vsel %vm406, %v289, 0.0
        %v408 = vsel %vm406, %v293, 0.0
        %v409 = vadd.f32 %v407, %v408
        %v410 = vsel %vm406, %v297, 0.0
        %v411 = vadd.f32 %v409, %v410
        %v412 = vsel %vm406, %v301, 0.0
        %v413 = vadd.f32 %v411, %v412
        %v414 = vsel %vm406, %v305, 0.0
        %v415 = vadd.f32 %v413, %v414
        %v416 = vsel %vm406, %v309, 0.0
        %v417 = vadd.f32 %v415, %v416
        %v418 = vsel %vm406, %v313, 0.0
        %v419 = vadd.f32 %v417, %v418
        %v420 = vsel %vm406, %v317, 0.0
        %v421 = vadd.f32 %v419, %v420
        %v422 = vsel %vm406, %v321, 0.0
        %v423 = vadd.f32 %v421, %v422
        %v424 = vsel %vm406, %v325, 0.0
        %v425 = vadd.f32 %v423, %v424
        %v426 = vsel %vm406, %v329, 0.0
        %v427 = vadd.f32 %v425, %v426
        %v428 = vsel %vm406, %v333, 0.0
        %v429 = vadd.f32 %v427, %v428
        %v430 = vsel %vm406, %v337, 0.0
        %v431 = vadd.f32 %v429, %v430
        %v432 = vsel %vm406, %v341, 0.0
        %v433 = vadd.f32 %v431, %v432
        %v434 = vsel %vm406, %v345, 0.0
        %v435 = vadd.f32 %v433, %v434
        %v436 = vsel %vm406, %v349, 0.0
        %v437 = vadd.f32 %v435, %v436
        %v438 = vsel %vm406, %v353, 0.0
        %v439 = vadd.f32 %v437, %v438
        %v440 = vsel %vm406, %v357, 0.0
        %v441 = vadd.f32 %v439, %v440
        %v442 = vsel %vm406, %v361, 0.0
        %v443 = vadd.f32 %v441, %v442
        %v444 = vsel %vm406, %v365, 0.0
        %v445 = vadd.f32 %v443, %v444
        %v446 = vsel %vm406, %v369, 0.0
        %v447 = vadd.f32 %v445, %v446
        %v448 = vsel %vm406, %v373, 0.0
        %v449 = vadd.f32 %v447, %v448
        %v450 = vsel %vm406, %v377, 0.0
        %v451 = vadd.f32 %v449, %v450
        %v452 = vsel %vm406, %v381, 0.0
        %v453 = vadd.f32 %v451, %v452
        %454 = vadd.xlane.f32.xlu0 %v453
        %v455 = vpop.xlane.xlu0 %454
        %v456 = vrot.slane %v455, 4
        %v457 = vadd.f32 %v455, %v456
        %v458 = vrot.slane %v457, 2
        %v459 = vadd.f32 %v457, %v458
        %v460 = vrot.slane %v459, 1
        %v461 = vadd.f32 %v459, %v460
        %s462 = vtos %v461
        %v466 = vlaneseq
        %v467 = vshrl.u32 %v466, 7
        %v468 = vsub.s32 0, %v467
        %v469 = vrot.slane %v280, %v468
        %v470 = vlaneseq
        %v471 = vshrl.u32 %v470, 7
        %v472 = vsub.s32 1, %v471
        %v473 = vrot.slane %v280, %v472
        %v474 = vlaneseq
        %v475 = vshrl.u32 %v474, 7
        %v476 = vsub.s32 2, %v475
        %v477 = vrot.slane %v280, %v476
        %v478 = vlaneseq
        %v479 = vshrl.u32 %v478, 7
        %v480 = vsub.s32 3, %v479
        %v481 = vrot.slane %v280, %v480
        %v482 = vlaneseq
        %v483 = vshrl.u32 %v482, 7
        %v484 = vsub.s32 4, %v483
        %v485 = vrot.slane %v280, %v484
        %v486 = vlaneseq
        %v487 = vshrl.u32 %v486, 7
        %v488 = vsub.s32 5, %v487
        %v489 = vrot.slane %v280, %v488
        %v490 = vlaneseq
        %v491 = vshrl.u32 %v490, 7
        %v492 = vsub.s32 6, %v491
        %v493 = vrot.slane %v280, %v492
        %v494 = vlaneseq
        %v495 = vshrl.u32 %v494, 7
        %v496 = vsub.s32 7, %v495
        %v497 = vrot.slane %v280, %v496
        %v498 = vlaneseq
        %v499 = vshrl.u32 %v498, 7
        %v500 = vsub.s32 0, %v499
        %v501 = vrot.slane %v281, %v500
        %v502 = vlaneseq
        %v503 = vshrl.u32 %v502, 7
        %v504 = vsub.s32 1, %v503
        %v505 = vrot.slane %v281, %v504
        %v506 = vlaneseq
        %v507 = vshrl.u32 %v506, 7
        %v508 = vsub.s32 2, %v507
        %v509 = vrot.slane %v281, %v508
        %v510 = vlaneseq
        %v511 = vshrl.u32 %v510, 7
        %v512 = vsub.s32 3, %v511
        %v513 = vrot.slane %v281, %v512
        %v514 = vlaneseq
        %v515 = vshrl.u32 %v514, 7
        %v516 = vsub.s32 4, %v515
        %v517 = vrot.slane %v281, %v516
        %v518 = vlaneseq
        %v519 = vshrl.u32 %v518, 7
        %v520 = vsub.s32 5, %v519
        %v521 = vrot.slane %v281, %v520
        %v522 = vlaneseq
        %v523 = vshrl.u32 %v522, 7
        %v524 = vsub.s32 6, %v523
        %v525 = vrot.slane %v281, %v524
        %v526 = vlaneseq
        %v527 = vshrl.u32 %v526, 7
        %v528 = vsub.s32 7, %v527
        %v529 = vrot.slane %v281, %v528
        %v530 = vlaneseq
        %v531 = vshrl.u32 %v530, 7
        %v532 = vsub.s32 0, %v531
        %v533 = vrot.slane %v282, %v532
        %v534 = vlaneseq
        %v535 = vshrl.u32 %v534, 7
        %v536 = vsub.s32 1, %v535
        %v537 = vrot.slane %v282, %v536
        %v538 = vlaneseq
        %v539 = vshrl.u32 %v538, 7
        %v540 = vsub.s32 2, %v539
        %v541 = vrot.slane %v282, %v540
        %v542 = vlaneseq
        %v543 = vshrl.u32 %v542, 7
        %v544 = vsub.s32 3, %v543
        %v545 = vrot.slane %v282, %v544
        %v546 = vlaneseq
        %v547 = vshrl.u32 %v546, 7
        %v548 = vsub.s32 4, %v547
        %v549 = vrot.slane %v282, %v548
        %v550 = vlaneseq
        %v551 = vshrl.u32 %v550, 7
        %v552 = vsub.s32 5, %v551
        %v553 = vrot.slane %v282, %v552
        %v554 = vlaneseq
        %v555 = vshrl.u32 %v554, 7
        %v556 = vsub.s32 6, %v555
        %v557 = vrot.slane %v282, %v556
        %v558 = vlaneseq
        %v559 = vshrl.u32 %v558, 7
        %v560 = vsub.s32 7, %v559
        %v561 = vrot.slane %v282, %v560
        %v586 = vsel %vm406, %v469, 0.0
        %v587 = vsel %vm406, %v473, 0.0
        %v588 = vadd.f32 %v586, %v587
        %v589 = vsel %vm406, %v477, 0.0
        %v590 = vadd.f32 %v588, %v589
        %v591 = vsel %vm406, %v481, 0.0
        %v592 = vadd.f32 %v590, %v591
        %v593 = vsel %vm406, %v485, 0.0
        %v594 = vadd.f32 %v592, %v593
        %v595 = vsel %vm406, %v489, 0.0
        %v596 = vadd.f32 %v594, %v595
        %v597 = vsel %vm406, %v493, 0.0
        %v598 = vadd.f32 %v596, %v597
        %v599 = vsel %vm406, %v497, 0.0
        %v600 = vadd.f32 %v598, %v599
        %v601 = vsel %vm406, %v501, 0.0
        %v602 = vadd.f32 %v600, %v601
        %v603 = vsel %vm406, %v505, 0.0
        %v604 = vadd.f32 %v602, %v603
        %v605 = vsel %vm406, %v509, 0.0
        %v606 = vadd.f32 %v604, %v605
        %v607 = vsel %vm406, %v513, 0.0
        %v608 = vadd.f32 %v606, %v607
        %v609 = vsel %vm406, %v517, 0.0
        %v610 = vadd.f32 %v608, %v609
        %v611 = vsel %vm406, %v521, 0.0
        %v612 = vadd.f32 %v610, %v611
        %v613 = vsel %vm406, %v525, 0.0
        %v614 = vadd.f32 %v612, %v613
        %v615 = vsel %vm406, %v529, 0.0
        %v616 = vadd.f32 %v614, %v615
        %v617 = vsel %vm406, %v533, 0.0
        %v618 = vadd.f32 %v616, %v617
        %v619 = vsel %vm406, %v537, 0.0
        %v620 = vadd.f32 %v618, %v619
        %v621 = vsel %vm406, %v541, 0.0
        %v622 = vadd.f32 %v620, %v621
        %v623 = vsel %vm406, %v545, 0.0
        %v624 = vadd.f32 %v622, %v623
        %v625 = vsel %vm406, %v549, 0.0
        %v626 = vadd.f32 %v624, %v625
        %v627 = vsel %vm406, %v553, 0.0
        %v628 = vadd.f32 %v626, %v627
        %v629 = vsel %vm406, %v557, 0.0
        %v630 = vadd.f32 %v628, %v629
        %v631 = vsel %vm406, %v561, 0.0
        %v632 = vadd.f32 %v630, %v631
        %633 = vadd.xlane.f32.xlu0 %v632
        %v634 = vpop.xlane.xlu0 %633
        %v635 = vrot.slane %v634, 4
        %v636 = vadd.f32 %v634, %v635
        %v637 = vrot.slane %v636, 2
        %v638 = vadd.f32 %v636, %v637
        %v639 = vrot.slane %v638, 1
        %v640 = vadd.f32 %v638, %v639
        %s641 = vtos %v640
        %s642 = sadd.f32 %s462, %s641
        %s643 = smul.f32 %s642, 0.00016276042
        %v644 = vstv %s643
        %v645 = vsub.f32 %v274, %v644
        %v646 = vsub.f32 %v275, %v644
        %v647 = vsub.f32 %v276, %v644
        %648 = vst [vmem:[%s255] sm:$0xff] %v645
        %649 = vst [vmem:[%s255 + $0x8] sm:$0xff] %v646
        %650 = vst [vmem:[%s255 + $0x10] sm:$0xff] %v647
        %v651 = vsub.f32 %v280, %v644
        %v652 = vsub.f32 %v281, %v644
        %v653 = vsub.f32 %v282, %v644
        %654 = vst [vmem:[%s262] sm:$0xff] %v651
        %655 = vst [vmem:[%s262 + $0x8] sm:$0xff] %v652
        %656 = vst [vmem:[%s262 + $0x10] sm:$0xff] %v653
        %vm657 = vcmask 0
        %658 = vst.msk [vmem:[%s270] sm:$0x1] %vm657, %v644
        %s659 = sand.u32 %s88, 1
        %s660 = scalar_lea.sflag [#allocation4], %s659
        %s661 = sand.u32 %s88, 1
        %s662 = smul.addr %s661, 24
        %s663 = scalar_lea.vmem [#allocation7], %s662
        %s664 = sand.u32 %s114, 1
        %s665 = scalar_lea.sflag [#allocation9], %s664
        %s666 = sand.u32 %s114, 1
        %s667 = smul.addr %s666, 24
        %s668 = scalar_lea.vmem [#allocation8], %s667
        %p669 = scmp.lt.s32.totalorder %s28, 1
        %s670 = scalar_select %p669, %s28, 1
        %s671 = scalar_lea.vmem %s4, %s670
        // Predicated region
        $region37: #{tpu_custom_call.1} parent=27 // pred_check
          %p672 = pneg %p98
        $region38: #{tpu_custom_call.1} parent=27 // pred_check_branch
          %674 = sbr.rel (%p672) target = $region40
        $region39: #{tpu_custom_call.1} parent=27 // pred_region
          %s676 = ssub.s32 384, 384
          %677 = vsyncadd %s660, %s676
          %s678 = smul.addr %s28, 24
          %s679 = smul.addr %s678, 16
          %s680 = scalar_lea.hbm %s2, %s679
          %s682 = sshll.u32 %s663, 4
          %s683 = int_to_ptr.vmem [resolvable:$true] %s682
          %685 = dma.vmem_to_hbm [thread:$0]  %s683, 384, %s680, %s660
        $region40: #{tpu_custom_call.1} parent=27 // pred_fallthru
          _
        // Predicated region
        $region41: #{tpu_custom_call.1} parent=27 // pred_check
          %p686 = pneg %p124
        $region42: #{tpu_custom_call.1} parent=27 // pred_check_branch
          %688 = sbr.rel (%p686) target = $region44
        $region43: #{tpu_custom_call.1} parent=27 // pred_region
          %s690 = ssub.s32 384, 384
          %691 = vsyncadd %s665, %s690
          %s692 = smul.addr %s28, 24
          %s693 = smul.addr %s692, 16
          %s694 = scalar_lea.hbm %s3, %s693
          %s696 = sshll.u32 %s668, 4
          %s697 = int_to_ptr.vmem [resolvable:$true] %s696
          %699 = dma.vmem_to_hbm [thread:$0]  %s697, 384, %s694, %s665
        $region44: #{tpu_custom_call.1} parent=27 // pred_fallthru
          _
        // Predicated region
        $region45: #{tpu_custom_call.1} parent=27 // pred_check
          %p700 = pneg %p150
        $region46: #{tpu_custom_call.1} parent=27 // pred_check_branch
          %702 = sbr.rel (%p700) target = $region48
        $region47: #{tpu_custom_call.1} parent=27 // pred_region
          _
        $region48: #{tpu_custom_call.1} parent=27 // pred_fallthru
          _
      $region28: #{tpu_custom_call.1} parent=5 // pred_fallthru
        _
      %p703 = scmp.le.s32.totalorder 2, %s23
      // Predicated region
      $region49: #{tpu_custom_call.1} parent=5 // pred_check
        %p704 = pneg %p703
      $region50: #{tpu_custom_call.1} parent=5 // pred_check_branch
        %706 = sbr.rel (%p704) target = $region52
      $region51: #{tpu_custom_call.1} parent=5 // pred_region
        %s707 = ssub.s32 %s23, 2
        // Predicated region
        $region53: #{tpu_custom_call.1} parent=51 // pred_check
          %p708 = pneg %p104
        $region54: #{tpu_custom_call.1} parent=51 // pred_check_branch
          %710 = sbr.rel (%p708) target = $region56
        $region55: #{tpu_custom_call.1} parent=51 // pred_region
          %s711 = sand.u32 %s89, 1
          %s712 = scalar_lea.sflag [#allocation4], %s711
          %s713 = sand.u32 %s89, 1
          %s714 = smul.addr %s713, 24
          %s715 = scalar_lea.vmem [#allocation7], %s714
          %716 = dma.done %s712, 384
        $region56: #{tpu_custom_call.1} parent=51 // pred_fallthru
          _
        // Predicated region
        $region57: #{tpu_custom_call.1} parent=51 // pred_check
          %p717 = pneg %p130
        $region58: #{tpu_custom_call.1} parent=51 // pred_check_branch
          %719 = sbr.rel (%p717) target = $region60
        $region59: #{tpu_custom_call.1} parent=51 // pred_region
          %s720 = sand.u32 %s115, 1
          %s721 = scalar_lea.sflag [#allocation9], %s720
          %s722 = sand.u32 %s115, 1
          %s723 = smul.addr %s722, 24
          %s724 = scalar_lea.vmem [#allocation8], %s723
          %725 = dma.done %s721, 384
        $region60: #{tpu_custom_call.1} parent=51 // pred_fallthru
          _
        // Predicated region
        $region61: #{tpu_custom_call.1} parent=51 // pred_check
          %p726 = pneg %p156
        $region62: #{tpu_custom_call.1} parent=51 // pred_check_branch
          %728 = sbr.rel (%p726) target = $region64
        $region63: #{tpu_custom_call.1} parent=51 // pred_region
          %p729 = scmp.lt.s32.totalorder %s29, 1
          %s730 = scalar_select %p729, %s29, 1
          %s731 = scalar_lea.vmem %s4, %s730
        $region64: #{tpu_custom_call.1} parent=51 // pred_fallthru
          _
      $region52: #{tpu_custom_call.1} parent=5 // pred_fallthru
        _
    $region6: #{tpu_custom_call.1} parent=1 // loop_footer
      %s27 = sadd.s32 1, %s23
    $region7: #{tpu_custom_call.1} parent=1 // loop_footer_branch
      %22 = sbr.rel target = $region3
    $region8: #{tpu_custom_call.1} parent=1 // loop_exit
      _
    %732 = vsyncpa [#allocation3], 1
    %s733 = scalar_lea.sflag [#allocation3], 1
    %734 = vsyncpa %s733, 1
    %735 = vsyncpa [#allocation6], 1
    %s736 = scalar_lea.sflag [#allocation6], 1
    %737 = vsyncpa %s736, 1
    %738 = vsyncpa [#allocation4], 1
    %s739 = scalar_lea.sflag [#allocation4], 1
    %740 = vsyncpa %s739, 1
    %741 = vsyncpa [#allocation9], 1
    %s742 = scalar_lea.sflag [#allocation9], 1
    %743 = vsyncpa %s742, 1

</llo_original>
